<compile_context>
chip_gen: v6e
topology: v6e:2x2x1
jax: 0.10.0
libtpu: 0.0.40
codegen_flags: <defaults>
</compile_context>

<pallas_src>
import functools

import jax
import jax.numpy as jnp
from jax import lax
from jax.experimental import pallas as pl
from jax.experimental.pallas import tpu as pltpu

EPS = 1e-5
NEG_SLOPE = 0.1


def _leaky(x):
    return jnp.where(x > 0, x, NEG_SLOPE * x)


def _round_up(x, m):
    return (x + m - 1) // m * m


def resiblock_kernel(x_ref, w1_ref, b1_ref, w2_ref, b2_ref, mask_ref, out_ref, *,
                     W, mxu_dtype):
    """Activation layout: (C_pad, L) = (sublanes, lanes); L = samples_per_block * H * W."""
    L = x_ref.shape[-1]
    x = x_ref[...]                                                     # (Cp, L) f32

    # ---- conv1: 1x1 conv (BN folded into w1/b1) + LeakyReLU; single MXU push, f32 acc ----
    y1 = jnp.dot(w1_ref[...], x.astype(mxu_dtype),
                 preferred_element_type=jnp.float32)                   # (Mp, L)
    y1 = _leaky(y1 + b1_ref[...])                                      # f32

    # ---- conv2: 3x3 conv (BN folded into w2/b2), stride 1, pad 1, as ONE matmul with
    #      K = 9*Mp. Each non-center tap is an XLU lane-roll of y1 plus one vmul with a
    #      precomputed {0,1} validity mask (wrapped / out-of-image lanes are exactly the
    #      masked-out ones; rolled values are finite so mask-multiply is safe). ----
    taps = []
    for k in range(9):
        dy, dx = k // 3 - 1, k % 3 - 1
        if dy == 0 and dx == 0:
            taps.append(y1)                                            # center tap: always valid
        else:
            off = dy * W + dx
            # shifted[p] = y1[(p + off) mod L]  (np.roll semantics, non-negative shift)
            shifted = pltpu.roll(y1, (-off) % L, axis=1)
            taps.append(shifted * mask_ref[k])
    taps = jnp.concatenate(taps, axis=0).astype(mxu_dtype)             # (9*Mp, L) im2col stack

    y2 = jnp.dot(w2_ref[...], taps, preferred_element_type=jnp.float32)  # (Cp, L)
    y2 = _leaky(y2 + b2_ref[...])

    # ---- residual add (requires Cin == Cout); padded channel rows stay exactly zero ----
    out_ref[...] = (y2 + x).astype(out_ref.dtype)


def _fold_bn_into_conv(w_oihw, gamma, beta, mean, var):
    """Fold inference-mode BatchNorm into the conv weight / bias.

    Returns weights as (kh*kw, Cout, Cin) tap-major and bias (Cout,)."""
    o, i, kh, kw = w_oihw.shape
    scale = gamma / jnp.sqrt(var + EPS)                                # (Cout,)
    w = (w_oihw * scale[:, None, None, None]).astype(jnp.float32)
    bias = (beta - mean * scale).astype(jnp.float32)
    w_taps = jnp.transpose(w, (2, 3, 0, 1)).reshape(kh * kw, o, i)
    return w_taps, bias


def _samples_per_block(n, s, max_lanes):
    """Largest divisor nb of n such that the (C, nb*s) block is legal and not too big."""
    for nb in range(n, 0, -1):
        if n % nb:
            continue
        if nb * s <= max_lanes and (nb == n or (nb * s) % 128 == 0):
            return nb
    return n  # block == full array lanes: always a legal BlockSpec


def _tap_masks(H, W, nb):
    """{0,1} validity mask per 3x3 tap, tiled per sample: (9, 1, nb*H*W) f32."""
    S = H * W
    pos = jnp.arange(S, dtype=jnp.int32)
    rows, cols = pos // W, pos % W
    masks = []
    for k in range(9):
        dy, dx = k // 3 - 1, k % 3 - 1
        valid = ((rows + dy >= 0) & (rows + dy < H) &
                 (cols + dx >= 0) & (cols + dx < W))
        masks.append(valid)
    m = jnp.stack(masks).astype(jnp.float32)                           # (9, S)
    return jnp.tile(m, (1, nb))[:, None, :]                            # (9, 1, nb*S)


def resiblock_forward(x_nchw, w1_oihw, w2_oihw, g1, b1, m1, v1, g2, b2, m2, v2, *,
                      mxu_dtype=jnp.bfloat16, max_block_lanes=32768):
    """x_nchw: (N, C, H, W); w1_oihw: (Cmid, Cin, 1, 1); w2_oihw: (Cout, Cmid, 3, 3)."""
    N, C, H, W = x_nchw.shape
    cmid = w1_oihw.shape[0]
    cout = w2_oihw.shape[0]
    assert C == cout, "residual requires in_channels == out_channels"
    assert w2_oihw.shape[1] == cmid
    S = H * W

    # ---- fold inference-mode BN into the conv weights / bias ----
    w1f, b1f = _fold_bn_into_conv(w1_oihw, g1, b1, m1, v1)   # (1,cmid,C), (cmid,)
    w2f, b2f = _fold_bn_into_conv(w2_oihw, g2, b2, m2, v2)   # (9,cout,cmid), (cout,)

    # ---- pad channel dims to a multiple of 8 sublanes (no masked partial vregs) ----
    Cp, Mp = _round_up(C, 8), _round_up(cmid, 8)
    w1p = jnp.zeros((Mp, Cp), jnp.float32).at[:cmid, :C].set(w1f[0]).astype(mxu_dtype)
    b1p = jnp.zeros((Mp, 1), jnp.float32).at[:cmid, 0].set(b1f)
    w2pad = jnp.zeros((9, cout, Mp), jnp.float32).at[:, :, :cmid].set(w2f)
    # K-stacked weight (Cout_p, 9*Mp); K index = tap*Mp + mid_channel (matches kernel concat).
    w2cat = jnp.zeros((Cp, 9 * Mp), jnp.float32).at[:cout, :].set(
        jnp.transpose(w2pad, (1, 0, 2)).reshape(cout, 9 * Mp)).astype(mxu_dtype)
    b2p = jnp.zeros((Cp, 1), jnp.float32).at[:cout, 0].set(b2f)

    # ---- activation layout: channels -> sublanes (padded), batch fused into lanes ----
    x_cs = jnp.transpose(x_nchw.reshape(N, C, S), (1, 0, 2)).reshape(C, N * S)
    x_cs = jnp.pad(x_cs, ((0, Cp - C), (0, 0)))

    nb = _samples_per_block(N, S, max_block_lanes)   # samples per grid step
    L = nb * S
    mask = _tap_masks(H, W, nb)                      # (9, 1, L) resident

    # VMEM budget from actual buffer sizes (double-buffered x/out + im2col intermediates).
    est = (2 * 2 * Cp * L * 4            # x + out blocks, double buffered, f32
           + 6 * 9 * Mp * L * 4          # tap stack + temporaries (generous)
           + (Mp * Cp + Cp * 9 * Mp + Mp + Cp) * 4
           + 9 * L * 4)
    vmem_limit = int(min(64 << 20, max(16 << 20, 2 * est)))

    kernel = functools.partial(resiblock_kernel, W=W, mxu_dtype=mxu_dtype)

    out_cs = pl.pallas_call(
        kernel,
        out_shape=jax.ShapeDtypeStruct((Cp, N * S), x_nchw.dtype),
        grid=(N // nb,),
        in_specs=[
            pl.BlockSpec((Cp, L), lambda i: (0, i)),          # x: nb samples / grid step
            pl.BlockSpec((Mp, Cp), lambda i: (0, 0)),         # w1 (resident)
            pl.BlockSpec((Mp, 1), lambda i: (0, 0)),          # b1 (resident)
            pl.BlockSpec((Cp, 9 * Mp), lambda i: (0, 0)),     # w2 K-stacked (resident)
            pl.BlockSpec((Cp, 1), lambda i: (0, 0)),          # b2 (resident)
            pl.BlockSpec((9, 1, L), lambda i: (0, 0, 0)),     # 3x3 tap masks (resident)
        ],
        out_specs=pl.BlockSpec((Cp, L), lambda i: (0, i)),
        compiler_params=pltpu.CompilerParams(
            dimension_semantics=("parallel",),
            vmem_limit_bytes=vmem_limit,
        ),
    )(x_cs, w1p, b1p, w2cat, b2p, mask)

    # strip channel padding, un-fuse batch from lanes
    return out_cs[:C].reshape(C, N, S).transpose(1, 0, 2).reshape(N, C, H, W)


def ref_forward(x, w1_t, w2_t, g1, b1, m1, v1, g2, b2, m2, v2):
    """Pure-JAX reference mirroring the PyTorch module (NCHW, OIHW weights, unfused BN)."""
    dn = ('NCHW', 'OIHW', 'NCHW')

    def bn(y, g, b, m, v):
        g, b, m, v = (p[None, :, None, None] for p in (g, b, m, v))
        return (y - m) / jnp.sqrt(v + EPS) * g + b

    def lk(y):
        return jnp.where(y > 0, y, NEG_SLOPE * y)

    y = lax.conv_general_dilated(x, w1_t, (1, 1), 'SAME', dimension_numbers=dn)
    y = lk(bn(y, g1, b1, m1, v1))
    y = lax.conv_general_dilated(y, w2_t, (1, 1), 'SAME', dimension_numbers=dn)
    y = lk(bn(y, g2, b2, m2, v2))
    return y + x


if __name__ == "__main__":
    N, C, H, W = 2, 4, 16, 16
    CIN = CMID = COUT = C

    key = jax.random.PRNGKey(0)
    keys = jax.random.split(key, 12)

    x = jax.random.normal(keys[0], (N, CIN, H, W), jnp.float32)

    # PyTorch-layout weights (OIHW), bias=False
    w1_torch = jax.random.normal(keys[1], (CMID, CIN, 1, 1), jnp.float32) * 0.3
    w2_torch = jax.random.normal(keys[2], (COUT, CMID, 3, 3), jnp.float32) * 0.1

    # BN (inference-mode) parameters for both ConvBlocks
    g1 = jax.random.uniform(keys[3], (CMID,), jnp.float32, 0.5, 1.5)
    b1 = jax.random.normal(keys[4], (CMID,), jnp.float32) * 0.1
    m1 = jax.random.normal(keys[5], (CMID,), jnp.float32) * 0.1
    v1 = jax.random.uniform(keys[6], (CMID,), jnp.float32, 0.5, 1.5)
    g2 = jax.random.uniform(keys[7], (COUT,), jnp.float32, 0.5, 1.5)
    b2 = jax.random.normal(keys[8], (COUT,), jnp.float32) * 0.1
    m2 = jax.random.normal(keys[9], (COUT,), jnp.float32) * 0.1
    v2 = jax.random.uniform(keys[10], (COUT,), jnp.float32, 0.5, 1.5)

    args = (x, w1_torch, w2_torch, g1, b1, m1, v1, g2, b2, m2, v2)

    ref = jax.block_until_ready(ref_forward(*args))

    # f32 MXU operands: tight structural check against the unfused reference.
    out_f32 = jax.block_until_ready(resiblock_forward(*args, mxu_dtype=jnp.float32))
    assert out_f32.shape == (N, C, H, W)
    assert jnp.allclose(out_f32, ref, atol=1e-4, rtol=1e-4), (
        f"f32 max abs err = {jnp.max(jnp.abs(out_f32 - ref))}")

    # bf16 MXU operands (v6e/v7x fast path); f32 accumulation + f32 elementwise math.
    out_bf16 = jax.block_until_ready(resiblock_forward(*args, mxu_dtype=jnp.bfloat16))
    assert out_bf16.shape == (N, C, H, W)
    assert jnp.allclose(out_bf16, ref, atol=1e-1, rtol=5e-2), (
        f"bf16 max abs err = {jnp.max(jnp.abs(out_bf16 - ref))}")

    print("KERNEL_OK")
</pallas_src>

<mosaic_0001>
module attributes {stable_mosaic.version = 11 : i64} {
  func.func @resiblock_kernel(%arg0: i32, %arg1: memref<8x512xf32, #tpu.memory_space<vmem>>, %arg2: memref<8x8xf32, #tpu.memory_space<vmem>>, %arg3: memref<8x1xf32, #tpu.memory_space<vmem>>, %arg4: memref<8x72xf32, #tpu.memory_space<vmem>>, %arg5: memref<8x1xf32, #tpu.memory_space<vmem>>, %arg6: memref<9x1x512xf32, #tpu.memory_space<vmem>>, %arg7: memref<8x512xf32, #tpu.memory_space<vmem>>) attributes {dimension_semantics = [#tpu.dimension_semantics<parallel>], iteration_bounds = array<i64: 1>, scalar_prefetch = 0 : i64, scratch_operands = 0 : i64, tpu.core_type = #tpu.core_type<tc>, window_params = [{transform_indices = @transform_0, window_bounds = array<i64: 8, 512>}, {pipeline_mode = #tpu.pipeline_mode<synchronous>, transform_indices = @transform_1, window_bounds = array<i64: 8, 8>}, {pipeline_mode = #tpu.pipeline_mode<synchronous>, transform_indices = @transform_2, window_bounds = array<i64: 8, 1>}, {pipeline_mode = #tpu.pipeline_mode<synchronous>, transform_indices = @transform_3, window_bounds = array<i64: 8, 72>}, {pipeline_mode = #tpu.pipeline_mode<synchronous>, transform_indices = @transform_4, window_bounds = array<i64: 8, 1>}, {pipeline_mode = #tpu.pipeline_mode<synchronous>, transform_indices = @transform_5, window_bounds = array<i64: 9, 1, 512>}, {transform_indices = @transform_6, window_bounds = array<i64: 8, 512>}]} {
    %c0 = arith.constant 0 : index
    %c0_0 = arith.constant 0 : index
    %0 = vector.load %arg1[%c0, %c0_0] : memref<8x512xf32, #tpu.memory_space<vmem>>, vector<8x512xf32>
    %c0_1 = arith.constant 0 : index
    %c0_2 = arith.constant 0 : index
    %1 = vector.load %arg2[%c0_1, %c0_2] : memref<8x8xf32, #tpu.memory_space<vmem>>, vector<8x8xf32>
    %cst = arith.constant dense<0.000000e+00> : vector<8x512xf32>
    %2 = tpu.matmul %1, %0, %cst {dimension_numbers = #tpu.dot_dimension_numbers<[1], [0], [0], [1], [0, 0, 1, 1], [], []>} : vector<8x8xf32>, vector<8x512xf32>, vector<8x512xf32> -> vector<8x512xf32>
    %c0_3 = arith.constant 0 : index
    %c0_4 = arith.constant 0 : index
    %3 = vector.load %arg3[%c0_3, %c0_4] : memref<8x1xf32, #tpu.memory_space<vmem>>, vector<8x1xf32>
    %4 = vector.broadcast %3 : vector<8x1xf32> to vector<8x512xf32>
    %5 = arith.addf %2, %4 : vector<8x512xf32>
    %cst_5 = arith.constant 0.000000e+00 : f32
    %6 = vector.broadcast %cst_5 : f32 to vector<8x512xf32>
    %7 = arith.cmpf ogt, %5, %6 : vector<8x512xf32>
    %cst_6 = arith.constant 1.000000e-01 : f32
    %8 = vector.broadcast %cst_6 : f32 to vector<8x512xf32>
    %9 = arith.mulf %8, %5 : vector<8x512xf32>
    %10 = arith.select %7, %5, %9 : vector<8x512xi1>, vector<8x512xf32>
    %c17_i32 = arith.constant 17 : i32
    %11 = tpu.dynamic_rotate %10 by %c17_i32 dim 1 : vector<8x512xf32>, i32 -> vector<8x512xf32>
    %c0_7 = arith.constant 0 : index
    %c0_8 = arith.constant 0 : index
    %c0_9 = arith.constant 0 : index
    %12 = vector.load %arg6[%c0_7, %c0_8, %c0_9] : memref<9x1x512xf32, #tpu.memory_space<vmem>>, vector<1x1x512xf32>
    %13 = vector.shape_cast %12 : vector<1x1x512xf32> to vector<1x512xf32>
    %14 = vector.broadcast %13 : vector<1x512xf32> to vector<8x512xf32>
    %15 = arith.mulf %11, %14 : vector<8x512xf32>
    %c16_i32 = arith.constant 16 : i32
    %16 = tpu.dynamic_rotate %10 by %c16_i32 dim 1 : vector<8x512xf32>, i32 -> vector<8x512xf32>
    %c1 = arith.constant 1 : index
    %c0_10 = arith.constant 0 : index
    %c0_11 = arith.constant 0 : index
    %17 = vector.load %arg6[%c1, %c0_10, %c0_11] : memref<9x1x512xf32, #tpu.memory_space<vmem>>, vector<1x1x512xf32>
    %18 = vector.shape_cast %17 : vector<1x1x512xf32> to vector<1x512xf32>
    %19 = vector.broadcast %18 : vector<1x512xf32> to vector<8x512xf32>
    %20 = arith.mulf %16, %19 : vector<8x512xf32>
    %c15_i32 = arith.constant 15 : i32
    %21 = tpu.dynamic_rotate %10 by %c15_i32 dim 1 : vector<8x512xf32>, i32 -> vector<8x512xf32>
    %c2 = arith.constant 2 : index
    %c0_12 = arith.constant 0 : index
    %c0_13 = arith.constant 0 : index
    %22 = vector.load %arg6[%c2, %c0_12, %c0_13] : memref<9x1x512xf32, #tpu.memory_space<vmem>>, vector<1x1x512xf32>
    %23 = vector.shape_cast %22 : vector<1x1x512xf32> to vector<1x512xf32>
    %24 = vector.broadcast %23 : vector<1x512xf32> to vector<8x512xf32>
    %25 = arith.mulf %21, %24 : vector<8x512xf32>
    %c1_i32 = arith.constant 1 : i32
    %26 = tpu.dynamic_rotate %10 by %c1_i32 dim 1 : vector<8x512xf32>, i32 -> vector<8x512xf32>
    %c3 = arith.constant 3 : index
    %c0_14 = arith.constant 0 : index
    %c0_15 = arith.constant 0 : index
    %27 = vector.load %arg6[%c3, %c0_14, %c0_15] : memref<9x1x512xf32, #tpu.memory_space<vmem>>, vector<1x1x512xf32>
    %28 = vector.shape_cast %27 : vector<1x1x512xf32> to vector<1x512xf32>
    %29 = vector.broadcast %28 : vector<1x512xf32> to vector<8x512xf32>
    %30 = arith.mulf %26, %29 : vector<8x512xf32>
    %c511_i32 = arith.constant 511 : i32
    %31 = tpu.dynamic_rotate %10 by %c511_i32 dim 1 : vector<8x512xf32>, i32 -> vector<8x512xf32>
    %c5 = arith.constant 5 : index
    %c0_16 = arith.constant 0 : index
    %c0_17 = arith.constant 0 : index
    %32 = vector.load %arg6[%c5, %c0_16, %c0_17] : memref<9x1x512xf32, #tpu.memory_space<vmem>>, vector<1x1x512xf32>
    %33 = vector.shape_cast %32 : vector<1x1x512xf32> to vector<1x512xf32>
    %34 = vector.broadcast %33 : vector<1x512xf32> to vector<8x512xf32>
    %35 = arith.mulf %31, %34 : vector<8x512xf32>
    %c497_i32 = arith.constant 497 : i32
    %36 = tpu.dynamic_rotate %10 by %c497_i32 dim 1 : vector<8x512xf32>, i32 -> vector<8x512xf32>
    %c6 = arith.constant 6 : index
    %c0_18 = arith.constant 0 : index
    %c0_19 = arith.constant 0 : index
    %37 = vector.load %arg6[%c6, %c0_18, %c0_19] : memref<9x1x512xf32, #tpu.memory_space<vmem>>, vector<1x1x512xf32>
    %38 = vector.shape_cast %37 : vector<1x1x512xf32> to vector<1x512xf32>
    %39 = vector.broadcast %38 : vector<1x512xf32> to vector<8x512xf32>
    %40 = arith.mulf %36, %39 : vector<8x512xf32>
    %c496_i32 = arith.constant 496 : i32
    %41 = tpu.dynamic_rotate %10 by %c496_i32 dim 1 : vector<8x512xf32>, i32 -> vector<8x512xf32>
    %c7 = arith.constant 7 : index
    %c0_20 = arith.constant 0 : index
    %c0_21 = arith.constant 0 : index
    %42 = vector.load %arg6[%c7, %c0_20, %c0_21] : memref<9x1x512xf32, #tpu.memory_space<vmem>>, vector<1x1x512xf32>
    %43 = vector.shape_cast %42 : vector<1x1x512xf32> to vector<1x512xf32>
    %44 = vector.broadcast %43 : vector<1x512xf32> to vector<8x512xf32>
    %45 = arith.mulf %41, %44 : vector<8x512xf32>
    %c495_i32 = arith.constant 495 : i32
    %46 = tpu.dynamic_rotate %10 by %c495_i32 dim 1 : vector<8x512xf32>, i32 -> vector<8x512xf32>
    %c8 = arith.constant 8 : index
    %c0_22 = arith.constant 0 : index
    %c0_23 = arith.constant 0 : index
    %47 = vector.load %arg6[%c8, %c0_22, %c0_23] : memref<9x1x512xf32, #tpu.memory_space<vmem>>, vector<1x1x512xf32>
    %48 = vector.shape_cast %47 : vector<1x1x512xf32> to vector<1x512xf32>
    %49 = vector.broadcast %48 : vector<1x512xf32> to vector<8x512xf32>
    %50 = arith.mulf %46, %49 : vector<8x512xf32>
    %51 = tpu.concatenate %15, %20, %25, %30, %10, %35, %40, %45, %50 in 0 : vector<8x512xf32>, vector<8x512xf32>, vector<8x512xf32>, vector<8x512xf32>, vector<8x512xf32>, vector<8x512xf32>, vector<8x512xf32>, vector<8x512xf32>, vector<8x512xf32> -> vector<72x512xf32>
    %c0_24 = arith.constant 0 : index
    %c0_25 = arith.constant 0 : index
    %52 = vector.load %arg4[%c0_24, %c0_25] : memref<8x72xf32, #tpu.memory_space<vmem>>, vector<8x72xf32>
    %cst_26 = arith.constant dense<0.000000e+00> : vector<8x512xf32>
    %53 = tpu.matmul %52, %51, %cst_26 {dimension_numbers = #tpu.dot_dimension_numbers<[1], [0], [0], [1], [0, 0, 1, 1], [], []>} : vector<8x72xf32>, vector<72x512xf32>, vector<8x512xf32> -> vector<8x512xf32>
    %c0_27 = arith.constant 0 : index
    %c0_28 = arith.constant 0 : index
    %54 = vector.load %arg5[%c0_27, %c0_28] : memref<8x1xf32, #tpu.memory_space<vmem>>, vector<8x1xf32>
    %55 = vector.broadcast %54 : vector<8x1xf32> to vector<8x512xf32>
    %56 = arith.addf %53, %55 : vector<8x512xf32>
    %cst_29 = arith.constant 0.000000e+00 : f32
    %57 = vector.broadcast %cst_29 : f32 to vector<8x512xf32>
    %58 = arith.cmpf ogt, %56, %57 : vector<8x512xf32>
    %cst_30 = arith.constant 1.000000e-01 : f32
    %59 = vector.broadcast %cst_30 : f32 to vector<8x512xf32>
    %60 = arith.mulf %59, %56 : vector<8x512xf32>
    %61 = arith.select %58, %56, %60 : vector<8x512xi1>, vector<8x512xf32>
    %62 = arith.addf %61, %0 : vector<8x512xf32>
    %c0_31 = arith.constant 0 : index
    %c0_32 = arith.constant 0 : index
    %63 = vector.load %arg7[%c0_31, %c0_32] : memref<8x512xf32, #tpu.memory_space<vmem>>, vector<8x512xf32>
    tpu.vector_store %arg7[%c0_31, %c0_32], %62 {strides = array<i32>} : memref<8x512xf32, #tpu.memory_space<vmem>>, vector<8x512xf32>,
    return
  }
  func.func @transform_0(%arg0: i32) -> (i32, i32) {
    %c0_i32 = arith.constant 0 : i32
    %c0_i32_0 = arith.constant 0 : i32
    return %c0_i32, %arg0 : i32, i32
  }
  func.func @transform_1(%arg0: i32) -> (i32, i32) {
    %c0_i32 = arith.constant 0 : i32
    %c0_i32_0 = arith.constant 0 : i32
    %c0_i32_1 = arith.constant 0 : i32
    return %c0_i32, %c0_i32_0 : i32, i32
  }
  func.func @transform_2(%arg0: i32) -> (i32, i32) {
    %c0_i32 = arith.constant 0 : i32
    %c0_i32_0 = arith.constant 0 : i32
    %c0_i32_1 = arith.constant 0 : i32
    return %c0_i32, %c0_i32_0 : i32, i32
  }
  func.func @transform_3(%arg0: i32) -> (i32, i32) {
    %c0_i32 = arith.constant 0 : i32
    %c0_i32_0 = arith.constant 0 : i32
    %c0_i32_1 = arith.constant 0 : i32
    return %c0_i32, %c0_i32_0 : i32, i32
  }
  func.func @transform_4(%arg0: i32) -> (i32, i32) {
    %c0_i32 = arith.constant 0 : i32
    %c0_i32_0 = arith.constant 0 : i32
    %c0_i32_1 = arith.constant 0 : i32
    return %c0_i32, %c0_i32_0 : i32, i32
  }
  func.func @transform_5(%arg0: i32) -> (i32, i32, i32) {
    %c0_i32 = arith.constant 0 : i32
    %c0_i32_0 = arith.constant 0 : i32
    %c0_i32_1 = arith.constant 0 : i32
    %c0_i32_2 = arith.constant 0 : i32
    return %c0_i32, %c0_i32_0, %c0_i32_1 : i32, i32, i32
  }
  func.func @transform_6(%arg0: i32) -> (i32, i32) {
    %c0_i32 = arith.constant 0 : i32
    %c0_i32_0 = arith.constant 0 : i32
    return %c0_i32, %arg0 : i32, i32
  }
}

</mosaic_0001>

<llo_original>
// kernel: tpu_custom_call.1
$region0: #{tpu_custom_call.1}
  #allocation0 [shape = 'u32[]', space=smem, size = 0x4, offset = 0x4, fixed_abs, tag = 'smem constant byte address 0x4 - core index']
  #allocation1 [shape = 'u32[144,128]{1,0:T(1,128)}', space=vmem, size = 0x12000, scoped, tag = 'internal scratch']
  %s0 = inlined_call_operand.hbm [shape: f32[8,512], index: 0, kind: input, shape index: {}]
  %s1 = inlined_call_operand.vmem [shape: f32[8,8], index: 1, kind: input, shape index: {}]
  %s2 = inlined_call_operand.vmem [shape: f32[8,1], index: 2, kind: input, shape index: {}]
  %s3 = inlined_call_operand.vmem [shape: f32[8,72], index: 3, kind: input, shape index: {}]
  %s4 = inlined_call_operand.vmem [shape: f32[8,1], index: 4, kind: input, shape index: {}]
  %s5 = inlined_call_operand.hbm [shape: f32[9,1,512], index: 5, kind: input, shape index: {}]
  %s6 = inlined_call_operand.hbm [shape: f32[8,512], index: 6, kind: output, shape index: {}]
  %s7 = sld [smem:[#allocation0]]
  $region42: #{tpu_custom_call.1} parent=0
    _
  %s9 = ssub.s32 1, %s7
  %s10 = scalar_select 0, %s9, %s7
  $region1: #{tpu_custom_call.1} parent=0
    #allocation2 [shape = 'u8[16384]{0}', space=vmem, size = 0x4000, scoped, tag = 'input window, operand 0, single buffered']
    #allocation3 [shape = 's32[1]{0}', space=sflag, size = 0x4, scoped, tag = 'scoped memory for tpu_custom_call.1']
    #allocation4 [shape = 's32[1]{0}', space=sflag, size = 0x4, scoped, tag = 'scoped memory for tpu_custom_call.1']
    #allocation5 [shape = 'u8[18432]{0}', space=vmem, size = 0x4800, scoped, tag = 'input window, operand 5, single buffered']
    #allocation6 [shape = 's32[1]{0}', space=sflag, size = 0x4, scoped, tag = 'scoped memory for tpu_custom_call.1']
    #allocation7 [shape = 'u8[16384]{0}', space=vmem, size = 0x4000, scoped, tag = 'output window, operand 0, single buffered']
    %11 = vsyncpa [#allocation3], 0
    %12 = vsyncpa [#allocation6], 0
    %13 = vsyncpa [#allocation4], 0
    // Predicated region
    $region2: #{tpu_custom_call.1} parent=1 // pred_check
      _
    $region3: #{tpu_custom_call.1} parent=1 // pred_check_branch
      %15 = sbr.rel (0) target = $region5
    $region4: #{tpu_custom_call.1} parent=1 // pred_region
      %s17 = ssub.s32 512, 512
      %18 = vsyncadd [#allocation3], %s17
      %s20 = sshll.u32 [#allocation2], 4
      %s21 = int_to_ptr.vmem [resolvable:$true] %s20
      %23 = dma.hbm_to_vmem [thread:$0]  %s0, 512, %s21, [#allocation3]
    $region5: #{tpu_custom_call.1} parent=1 // pred_fallthru
      _
    // Predicated region
    $region6: #{tpu_custom_call.1} parent=1 // pred_check
      _
    $region7: #{tpu_custom_call.1} parent=1 // pred_check_branch
      %25 = sbr.rel (0) target = $region9
    $region8: #{tpu_custom_call.1} parent=1 // pred_region
      _
    $region9: #{tpu_custom_call.1} parent=1 // pred_fallthru
      _
    // Predicated region
    $region10: #{tpu_custom_call.1} parent=1 // pred_check
      _
    $region11: #{tpu_custom_call.1} parent=1 // pred_check_branch
      %27 = sbr.rel (0) target = $region13
    $region12: #{tpu_custom_call.1} parent=1 // pred_region
      _
    $region13: #{tpu_custom_call.1} parent=1 // pred_fallthru
      _
    // Predicated region
    $region14: #{tpu_custom_call.1} parent=1 // pred_check
      _
    $region15: #{tpu_custom_call.1} parent=1 // pred_check_branch
      %29 = sbr.rel (0) target = $region17
    $region16: #{tpu_custom_call.1} parent=1 // pred_region
      _
    $region17: #{tpu_custom_call.1} parent=1 // pred_fallthru
      _
    // Predicated region
    $region18: #{tpu_custom_call.1} parent=1 // pred_check
      _
    $region19: #{tpu_custom_call.1} parent=1 // pred_check_branch
      %31 = sbr.rel (0) target = $region21
    $region20: #{tpu_custom_call.1} parent=1 // pred_region
      _
    $region21: #{tpu_custom_call.1} parent=1 // pred_fallthru
      _
    // Predicated region
    $region22: #{tpu_custom_call.1} parent=1 // pred_check
      _
    $region23: #{tpu_custom_call.1} parent=1 // pred_check_branch
      %33 = sbr.rel (0) target = $region25
    $region24: #{tpu_custom_call.1} parent=1 // pred_region
      %s35 = ssub.s32 576, 576
      %36 = vsyncadd [#allocation6], %s35
      %s37 = sshll.u32 [#allocation5], 4
      %s38 = int_to_ptr.vmem [resolvable:$true] %s37
      %43 = dma.hbm_to_vmem [thread:$0]  %s5, 576, %s38, [#allocation6], 64, 64, 4
    $region25: #{tpu_custom_call.1} parent=1 // pred_fallthru
      _
    // Predicated region
    $region26: #{tpu_custom_call.1} parent=1 // pred_check
      _
    $region27: #{tpu_custom_call.1} parent=1 // pred_check_branch
      %45 = sbr.rel (0) target = $region29
    $region28: #{tpu_custom_call.1} parent=1 // pred_region
      %46 = dma.done [#allocation3], 512
    $region29: #{tpu_custom_call.1} parent=1 // pred_fallthru
      _
    // Predicated region
    $region30: #{tpu_custom_call.1} parent=1 // pred_check
      _
    $region31: #{tpu_custom_call.1} parent=1 // pred_check_branch
      %48 = sbr.rel (0) target = $region33
    $region32: #{tpu_custom_call.1} parent=1 // pred_region
      %49 = dma.done [#allocation6], 576
    $region33: #{tpu_custom_call.1} parent=1 // pred_fallthru
      _
    %v50 = vld [vmem:[#allocation2] sm:$0xff]
    %v51 = vld [vmem:[#allocation2 + $0x8] sm:$0xff]
    %v52 = vld [vmem:[#allocation2 + $0x10] sm:$0xff]
    %v53 = vld [vmem:[#allocation2 + $0x18] sm:$0xff]
    %v54 = vld [vmem:[%s1] sm:$0xff]
    %v55 = vld [vmem:[%s2] sm:$0xff]
    %57 = vset.pattern.permute.xlu0 0
    %58 = vperm.xlu0 %57, %v55
    %v59 = vpop.permute.xlu0 %58
    %vm61 = vcmask 64512
    %v63 = vsel %vm61, %v54, 0
    %65 = vmatprep.subr.mxu0 0.0
    %66 = vmatpush1.msra.mxu0 0.0
    %67 = vmatprep.subr.mxu0 0.0
    %68 = vmatpush1.msra.mxu0 0.0
    %69 = vmatprep.subr.mxu0 0.0
    %70 = vmatpush1.msra.mxu0 0.0
    %71 = vmatprep.subr.mxu0 0.0
    %72 = vmatpush1.msra.mxu0 0.0
    %73 = vmatprep.subr.mxu0 0.0
    %74 = vmatpush1.msra.mxu0 0.0
    %75 = vmatprep.subr.mxu0 0.0
    %76 = vmatpush1.msra.mxu0 0.0
    %77 = vmatprep.subr.mxu0 0.0
    %78 = vmatpush1.msra.mxu0 0.0
    %79 = vmatprep.subr.mxu0 0.0
    %80 = vmatpush1.msra.mxu0 0.0
    %81 = vmatprep.subr.mxu0 0.0
    %82 = vmatpush1.msra.mxu0 0.0
    %83 = vmatprep.subr.mxu0 0.0
    %84 = vmatpush1.msra.mxu0 0.0
    %85 = vmatprep.subr.mxu0 0.0
    %86 = vmatpush1.msra.mxu0 0.0
    %87 = vmatprep.subr.mxu0 0.0
    %88 = vmatpush1.msra.mxu0 0.0
    %89 = vmatprep.subr.mxu0 0.0
    %90 = vmatpush1.msra.mxu0 0.0
    %91 = vmatprep.subr.mxu0 0.0
    %92 = vmatpush1.msra.mxu0 0.0
    %93 = vmatprep.subr.mxu0 0.0
    %94 = vmatpush1.msra.mxu0 0.0
    %95 = vmatprep.subr.mxu0 %v51
    %96 = vmatpush1.msra.mxu0 %v50
    %97 = vmatprep.subr.mxu0 0.0
    %98 = vmatpush2.msra.mxu0 0.0
    %99 = vmatprep.subr.mxu0 0.0
    %100 = vmatpush2.msra.mxu0 0.0
    %101 = vmatprep.subr.mxu0 0.0
    %102 = vmatpush2.msra.mxu0 0.0
    %103 = vmatprep.subr.mxu0 0.0
    %104 = vmatpush2.msra.mxu0 0.0
    %105 = vmatprep.subr.mxu0 0.0
    %106 = vmatpush2.msra.mxu0 0.0
    %107 = vmatprep.subr.mxu0 0.0
    %108 = vmatpush2.msra.mxu0 0.0
    %109 = vmatprep.subr.mxu0 0.0
    %110 = vmatpush2.msra.mxu0 0.0
    %111 = vmatprep.subr.mxu0 0.0
    %112 = vmatpush2.msra.mxu0 0.0
    %113 = vmatprep.subr.mxu0 0.0
    %114 = vmatpush2.msra.mxu0 0.0
    %115 = vmatprep.subr.mxu0 0.0
    %116 = vmatpush2.msra.mxu0 0.0
    %117 = vmatprep.subr.mxu0 0.0
    %118 = vmatpush2.msra.mxu0 0.0
    %119 = vmatprep.subr.mxu0 0.0
    %120 = vmatpush2.msra.mxu0 0.0
    %121 = vmatprep.subr.mxu0 0.0
    %122 = vmatpush2.msra.mxu0 0.0
    %123 = vmatprep.subr.mxu0 0.0
    %124 = vmatpush2.msra.mxu0 0.0
    %125 = vmatprep.subr.mxu0 0.0
    %126 = vmatpush2.msra.mxu0 0.0
    %127 = vmatprep.subr.mxu0 0.0
    %128 = vmatpush2.msra.mxu0 0.0
    %129 = vmatprep.mubr.f32.mxu0 0.0
    %130 = vmatmul.mubr.f32.gmra.mxu0 %v63
    %v131 = vpop.f32.mrf.mxu0
    %v132 = vadd.f32 %v59, %v131
    %v133 = vpop.f32.mrf.mxu0
    %v134 = vadd.f32 %v59, %v133
    %135 = vdwg.mxu0
    %136 = vmatprep.subr.mxu0 0.0
    %137 = vmatpush1.msra.mxu0 0.0
    %138 = vmatprep.subr.mxu0 0.0
    %139 = vmatpush1.msra.mxu0 0.0
    %140 = vmatprep.subr.mxu0 0.0
    %141 = vmatpush1.msra.mxu0 0.0
    %142 = vmatprep.subr.mxu0 0.0
    %143 = vmatpush1.msra.mxu0 0.0
    %144 = vmatprep.subr.mxu0 0.0
    %145 = vmatpush1.msra.mxu0 0.0
    %146 = vmatprep.subr.mxu0 0.0
    %147 = vmatpush1.msra.mxu0 0.0
    %148 = vmatprep.subr.mxu0 0.0
    %149 = vmatpush1.msra.mxu0 0.0
    %150 = vmatprep.subr.mxu0 0.0
    %151 = vmatpush1.msra.mxu0 0.0
    %152 = vmatprep.subr.mxu0 0.0
    %153 = vmatpush1.msra.mxu0 0.0
    %154 = vmatprep.subr.mxu0 0.0
    %155 = vmatpush1.msra.mxu0 0.0
    %156 = vmatprep.subr.mxu0 0.0
    %157 = vmatpush1.msra.mxu0 0.0
    %158 = vmatprep.subr.mxu0 0.0
    %159 = vmatpush1.msra.mxu0 0.0
    %160 = vmatprep.subr.mxu0 0.0
    %161 = vmatpush1.msra.mxu0 0.0
    %162 = vmatprep.subr.mxu0 0.0
    %163 = vmatpush1.msra.mxu0 0.0
    %164 = vmatprep.subr.mxu0 0.0
    %165 = vmatpush1.msra.mxu0 0.0
    %166 = vmatprep.subr.mxu0 %v53
    %167 = vmatpush1.msra.mxu0 %v52
    %168 = vmatprep.subr.mxu0 0.0
    %169 = vmatpush2.msra.mxu0 0.0
    %170 = vmatprep.subr.mxu0 0.0
    %171 = vmatpush2.msra.mxu0 0.0
    %172 = vmatprep.subr.mxu0 0.0
    %173 = vmatpush2.msra.mxu0 0.0
    %174 = vmatprep.subr.mxu0 0.0
    %175 = vmatpush2.msra.mxu0 0.0
    %176 = vmatprep.subr.mxu0 0.0
    %177 = vmatpush2.msra.mxu0 0.0
    %178 = vmatprep.subr.mxu0 0.0
    %179 = vmatpush2.msra.mxu0 0.0
    %180 = vmatprep.subr.mxu0 0.0
    %181 = vmatpush2.msra.mxu0 0.0
    %182 = vmatprep.subr.mxu0 0.0
    %183 = vmatpush2.msra.mxu0 0.0
    %184 = vmatprep.subr.mxu0 0.0
    %185 = vmatpush2.msra.mxu0 0.0
    %186 = vmatprep.subr.mxu0 0.0
    %187 = vmatpush2.msra.mxu0 0.0
    %188 = vmatprep.subr.mxu0 0.0
    %189 = vmatpush2.msra.mxu0 0.0
    %190 = vmatprep.subr.mxu0 0.0
    %191 = vmatpush2.msra.mxu0 0.0
    %192 = vmatprep.subr.mxu0 0.0
    %193 = vmatpush2.msra.mxu0 0.0
    %194 = vmatprep.subr.mxu0 0.0
    %195 = vmatpush2.msra.mxu0 0.0
    %196 = vmatprep.subr.mxu0 0.0
    %197 = vmatpush2.msra.mxu0 0.0
    %198 = vmatprep.subr.mxu0 0.0
    %199 = vmatpush2.msra.mxu0 0.0
    %200 = vmatprep.mubr.f32.mxu0 0.0
    %201 = vmatmul.mubr.f32.gmra.mxu0 %v63
    %v202 = vpop.f32.mrf.mxu0
    %v203 = vadd.f32 %v59, %v202
    %v204 = vpop.f32.mrf.mxu0
    %v205 = vadd.f32 %v59, %v204
    %206 = vdwg.mxu0
    %vm207 = vcmp.gt.f32.partialorder %v132, 0.0
    %vm208 = vcmp.gt.f32.partialorder %v134, 0.0
    %vm209 = vcmp.gt.f32.partialorder %v203, 0.0
    %vm210 = vcmp.gt.f32.partialorder %v205, 0.0
    %v211 = vmul.f32 %v132, 0.1
    %v212 = vmul.f32 %v134, 0.1
    %v213 = vmul.f32 %v203, 0.1
    %v214 = vmul.f32 %v205, 0.1
    %v215 = vsel %vm207, %v132, %v211
    %v216 = vsel %vm208, %v134, %v212
    %v217 = vsel %vm209, %v203, %v213
    %v218 = vsel %vm210, %v205, %v214
    %219 = vrot.lane.b32.xlu0 %v215, 17
    %v220 = vpop.permute.xlu0 %219
    %221 = vrot.lane.b32.xlu0 %v216, 17
    %v222 = vpop.permute.xlu0 %221
    %223 = vrot.lane.b32.xlu0 %v217, 17
    %v224 = vpop.permute.xlu0 %223
    %225 = vrot.lane.b32.xlu0 %v218, 17
    %v226 = vpop.permute.xlu0 %225
    %v227 = vlaneseq
    %v228 = vand.u32 %v227, 127
    %vm229 = vcmp.lt.s32.totalorder %v228, 17
    %v230 = vsel %vm229, %v224, %v226
    %v231 = vsel %vm229, %v222, %v224
    %v232 = vsel %vm229, %v220, %v222
    %v233 = vsel %vm229, %v226, %v220
    %v234 = vld [vmem:[#allocation5] sm:$0xf]
    %v236 = vlaneseq
    %v237 = vshrl.u32 %v236, 7
    %v238 = vsub.s32 0, %v237
    %v239 = vrot.slane %v234, %v238
    %v240 = vlaneseq
    %v241 = vshrl.u32 %v240, 7
    %v242 = vsub.s32 1, %v241
    %v243 = vrot.slane %v234, %v242
    %v244 = vlaneseq
    %v245 = vshrl.u32 %v244, 7
    %v246 = vsub.s32 2, %v245
    %v247 = vrot.slane %v234, %v246
    %v248 = vlaneseq
    %v249 = vshrl.u32 %v248, 7
    %v250 = vsub.s32 3, %v249
    %v251 = vrot.slane %v234, %v250
    %v256 = vmul.f32 %v233, %v239
    %v257 = vmul.f32 %v232, %v243
    %v258 = vmul.f32 %v231, %v247
    %v259 = vmul.f32 %v230, %v251
    %260 = vrot.lane.b32.xlu0 %v215, 16
    %v261 = vpop.permute.xlu0 %260
    %262 = vrot.lane.b32.xlu0 %v216, 16
    %v263 = vpop.permute.xlu0 %262
    %264 = vrot.lane.b32.xlu0 %v217, 16
    %v265 = vpop.permute.xlu0 %264
    %266 = vrot.lane.b32.xlu0 %v218, 16
    %v267 = vpop.permute.xlu0 %266
    %vm268 = vcmp.lt.s32.totalorder %v228, 16
    %v269 = vsel %vm268, %v265, %v267
    %v270 = vsel %vm268, %v263, %v265
    %v271 = vsel %vm268, %v261, %v263
    %v272 = vsel %vm268, %v267, %v261
    %s273 = scalar_lea.vmem [#allocation5], 4
    %v274 = vld [vmem:[%s273] sm:$0xf]
    %v276 = vlaneseq
    %v277 = vshrl.u32 %v276, 7
    %v278 = vsub.s32 0, %v277
    %v279 = vrot.slane %v274, %v278
    %v280 = vlaneseq
    %v281 = vshrl.u32 %v280, 7
    %v282 = vsub.s32 1, %v281
    %v283 = vrot.slane %v274, %v282
    %v284 = vlaneseq
    %v285 = vshrl.u32 %v284, 7
    %v286 = vsub.s32 2, %v285
    %v287 = vrot.slane %v274, %v286
    %v288 = vlaneseq
    %v289 = vshrl.u32 %v288, 7
    %v290 = vsub.s32 3, %v289
    %v291 = vrot.slane %v274, %v290
    %v296 = vmul.f32 %v272, %v279
    %v297 = vmul.f32 %v271, %v283
    %v298 = vmul.f32 %v270, %v287
    %v299 = vmul.f32 %v269, %v291
    %300 = vrot.lane.b32.xlu0 %v215, 15
    %v301 = vpop.permute.xlu0 %300
    %302 = vrot.lane.b32.xlu0 %v216, 15
    %v303 = vpop.permute.xlu0 %302
    %304 = vrot.lane.b32.xlu0 %v217, 15
    %v305 = vpop.permute.xlu0 %304
    %306 = vrot.lane.b32.xlu0 %v218, 15
    %v307 = vpop.permute.xlu0 %306
    %vm308 = vcmp.lt.s32.totalorder %v228, 15
    %v309 = vsel %vm308, %v305, %v307
    %v310 = vsel %vm308, %v303, %v305
    %v311 = vsel %vm308, %v301, %v303
    %v312 = vsel %vm308, %v307, %v301
    %s313 = scalar_lea.vmem [#allocation5], 8
    %v314 = vld [vmem:[%s313] sm:$0xf]
    %v316 = vlaneseq
    %v317 = vshrl.u32 %v316, 7
    %v318 = vsub.s32 0, %v317
    %v319 = vrot.slane %v314, %v318
    %v320 = vlaneseq
    %v321 = vshrl.u32 %v320, 7
    %v322 = vsub.s32 1, %v321
    %v323 = vrot.slane %v314, %v322
    %v324 = vlaneseq
    %v325 = vshrl.u32 %v324, 7
    %v326 = vsub.s32 2, %v325
    %v327 = vrot.slane %v314, %v326
    %v328 = vlaneseq
    %v329 = vshrl.u32 %v328, 7
    %v330 = vsub.s32 3, %v329
    %v331 = vrot.slane %v314, %v330
    %v336 = vmul.f32 %v312, %v319
    %v337 = vmul.f32 %v311, %v323
    %v338 = vmul.f32 %v310, %v327
    %v339 = vmul.f32 %v309, %v331
    %340 = vrot.lane.b32.xlu0 %v215, 1
    %v341 = vpop.permute.xlu0 %340
    %342 = vrot.lane.b32.xlu0 %v216, 1
    %v343 = vpop.permute.xlu0 %342
    %344 = vrot.lane.b32.xlu0 %v217, 1
    %v345 = vpop.permute.xlu0 %344
    %346 = vrot.lane.b32.xlu0 %v218, 1
    %v347 = vpop.permute.xlu0 %346
    %vm348 = vcmp.lt.s32.totalorder %v228, 1
    %v349 = vsel %vm348, %v345, %v347
    %v350 = vsel %vm348, %v343, %v345
    %v351 = vsel %vm348, %v341, %v343
    %v352 = vsel %vm348, %v347, %v341
    %s353 = scalar_lea.vmem [#allocation5], 12
    %v354 = vld [vmem:[%s353] sm:$0xf]
    %v356 = vlaneseq
    %v357 = vshrl.u32 %v356, 7
    %v358 = vsub.s32 0, %v357
    %v359 = vrot.slane %v354, %v358
    %v360 = vlaneseq
    %v361 = vshrl.u32 %v360, 7
    %v362 = vsub.s32 1, %v361
    %v363 = vrot.slane %v354, %v362
    %v364 = vlaneseq
    %v365 = vshrl.u32 %v364, 7
    %v366 = vsub.s32 2, %v365
    %v367 = vrot.slane %v354, %v366
    %v368 = vlaneseq
    %v369 = vshrl.u32 %v368, 7
    %v370 = vsub.s32 3, %v369
    %v371 = vrot.slane %v354, %v370
    %v376 = vmul.f32 %v352, %v359
    %v377 = vmul.f32 %v351, %v363
    %v378 = vmul.f32 %v350, %v367
    %v379 = vmul.f32 %v349, %v371
    %380 = vrot.lane.b32.xlu0 %v215, 127
    %v381 = vpop.permute.xlu0 %380
    %382 = vrot.lane.b32.xlu0 %v216, 127
    %v383 = vpop.permute.xlu0 %382
    %384 = vrot.lane.b32.xlu0 %v217, 127
    %v385 = vpop.permute.xlu0 %384
    %386 = vrot.lane.b32.xlu0 %v218, 127
    %v387 = vpop.permute.xlu0 %386
    %vm388 = vcmp.lt.s32.totalorder %v228, 127
    %v389 = vsel %vm388, %v385, %v387
    %v390 = vsel %vm388, %v383, %v385
    %v391 = vsel %vm388, %v381, %v383
    %v392 = vsel %vm388, %v387, %v381
    %s393 = scalar_lea.vmem [#allocation5], 20
    %v394 = vld [vmem:[%s393] sm:$0xf]
    %v396 = vlaneseq
    %v397 = vshrl.u32 %v396, 7
    %v398 = vsub.s32 0, %v397
    %v399 = vrot.slane %v394, %v398
    %v400 = vlaneseq
    %v401 = vshrl.u32 %v400, 7
    %v402 = vsub.s32 1, %v401
    %v403 = vrot.slane %v394, %v402
    %v404 = vlaneseq
    %v405 = vshrl.u32 %v404, 7
    %v406 = vsub.s32 2, %v405
    %v407 = vrot.slane %v394, %v406
    %v408 = vlaneseq
    %v409 = vshrl.u32 %v408, 7
    %v410 = vsub.s32 3, %v409
    %v411 = vrot.slane %v394, %v410
    %v416 = vmul.f32 %v391, %v399
    %v417 = vmul.f32 %v390, %v403
    %v418 = vmul.f32 %v389, %v407
    %v419 = vmul.f32 %v392, %v411
    %420 = vrot.lane.b32.xlu0 %v215, 113
    %v421 = vpop.permute.xlu0 %420
    %422 = vrot.lane.b32.xlu0 %v216, 113
    %v423 = vpop.permute.xlu0 %422
    %424 = vrot.lane.b32.xlu0 %v217, 113
    %v425 = vpop.permute.xlu0 %424
    %426 = vrot.lane.b32.xlu0 %v218, 113
    %v427 = vpop.permute.xlu0 %426
    %vm428 = vcmp.lt.s32.totalorder %v228, 113
    %v429 = vsel %vm428, %v425, %v427
    %v430 = vsel %vm428, %v423, %v425
    %v431 = vsel %vm428, %v421, %v423
    %v432 = vsel %vm428, %v427, %v421
    %s433 = scalar_lea.vmem [#allocation5], 24
    %v434 = vld [vmem:[%s433] sm:$0xf]
    %v436 = vlaneseq
    %v437 = vshrl.u32 %v436, 7
    %v438 = vsub.s32 0, %v437
    %v439 = vrot.slane %v434, %v438
    %v440 = vlaneseq
    %v441 = vshrl.u32 %v440, 7
    %v442 = vsub.s32 1, %v441
    %v443 = vrot.slane %v434, %v442
    %v444 = vlaneseq
    %v445 = vshrl.u32 %v444, 7
    %v446 = vsub.s32 2, %v445
    %v447 = vrot.slane %v434, %v446
    %v448 = vlaneseq
    %v449 = vshrl.u32 %v448, 7
    %v450 = vsub.s32 3, %v449
    %v451 = vrot.slane %v434, %v450
    %v456 = vmul.f32 %v431, %v439
    %v457 = vmul.f32 %v430, %v443
    %v458 = vmul.f32 %v429, %v447
    %v459 = vmul.f32 %v432, %v451
    %460 = vrot.lane.b32.xlu0 %v215, 112
    %v461 = vpop.permute.xlu0 %460
    %462 = vrot.lane.b32.xlu0 %v216, 112
    %v463 = vpop.permute.xlu0 %462
    %464 = vrot.lane.b32.xlu0 %v217, 112
    %v465 = vpop.permute.xlu0 %464
    %466 = vrot.lane.b32.xlu0 %v218, 112
    %v467 = vpop.permute.xlu0 %466
    %vm468 = vcmp.lt.s32.totalorder %v228, 112
    %v469 = vsel %vm468, %v465, %v467
    %v470 = vsel %vm468, %v463, %v465
    %v471 = vsel %vm468, %v461, %v463
    %v472 = vsel %vm468, %v467, %v461
    %s473 = scalar_lea.vmem [#allocation5], 28
    %v474 = vld [vmem:[%s473] sm:$0xf]
    %v476 = vlaneseq
    %v477 = vshrl.u32 %v476, 7
    %v478 = vsub.s32 0, %v477
    %v479 = vrot.slane %v474, %v478
    %v480 = vlaneseq
    %v481 = vshrl.u32 %v480, 7
    %v482 = vsub.s32 1, %v481
    %v483 = vrot.slane %v474, %v482
    %v484 = vlaneseq
    %v485 = vshrl.u32 %v484, 7
    %v486 = vsub.s32 2, %v485
    %v487 = vrot.slane %v474, %v486
    %v488 = vlaneseq
    %v489 = vshrl.u32 %v488, 7
    %v490 = vsub.s32 3, %v489
    %v491 = vrot.slane %v474, %v490
    %v496 = vmul.f32 %v471, %v479
    %v497 = vmul.f32 %v470, %v483
    %v498 = vmul.f32 %v469, %v487
    %v499 = vmul.f32 %v472, %v491
    %500 = vrot.lane.b32.xlu0 %v215, 111
    %v501 = vpop.permute.xlu0 %500
    %502 = vrot.lane.b32.xlu0 %v216, 111
    %v503 = vpop.permute.xlu0 %502
    %504 = vrot.lane.b32.xlu0 %v217, 111
    %v505 = vpop.permute.xlu0 %504
    %506 = vrot.lane.b32.xlu0 %v218, 111
    %v507 = vpop.permute.xlu0 %506
    %vm508 = vcmp.lt.s32.totalorder %v228, 111
    %v509 = vsel %vm508, %v505, %v507
    %v510 = vsel %vm508, %v503, %v505
    %v511 = vsel %vm508, %v501, %v503
    %v512 = vsel %vm508, %v507, %v501
    %s513 = scalar_lea.vmem [#allocation5], 32
    %v514 = vld [vmem:[%s513] sm:$0xf]
    %v516 = vlaneseq
    %v517 = vshrl.u32 %v516, 7
    %v518 = vsub.s32 0, %v517
    %v519 = vrot.slane %v514, %v518
    %v520 = vlaneseq
    %v521 = vshrl.u32 %v520, 7
    %v522 = vsub.s32 1, %v521
    %v523 = vrot.slane %v514, %v522
    %v524 = vlaneseq
    %v525 = vshrl.u32 %v524, 7
    %v526 = vsub.s32 2, %v525
    %v527 = vrot.slane %v514, %v526
    %v528 = vlaneseq
    %v529 = vshrl.u32 %v528, 7
    %v530 = vsub.s32 3, %v529
    %v531 = vrot.slane %v514, %v530
    %v536 = vmul.f32 %v511, %v519
    %v537 = vmul.f32 %v510, %v523
    %v538 = vmul.f32 %v509, %v527
    %v539 = vmul.f32 %v512, %v531
    %v540 = vld [vmem:[%s3] sm:$0xff]
    %v541 = vld [vmem:[%s4] sm:$0xff]
    %543 = vset.pattern.permute.xlu0 0
    %544 = vperm.xlu0 %543, %v541
    %v545 = vpop.permute.xlu0 %544
    %vm547 = vcmask 588800
    %v549 = vsel %vm547, %v540, 0
    %551 = vmatprep.subr.mxu0 0.0
    %552 = vmatpush1.msra.mxu0 0.0
    %553 = vmatprep.subr.mxu0 0.0
    %554 = vmatpush1.msra.mxu0 0.0
    %555 = vmatprep.subr.mxu0 0.0
    %556 = vmatpush1.msra.mxu0 0.0
    %557 = vmatprep.subr.mxu0 0.0
    %558 = vmatpush1.msra.mxu0 0.0
    %559 = vmatprep.subr.mxu0 0.0
    %560 = vmatpush1.msra.mxu0 0.0
    %561 = vmatprep.subr.mxu0 0.0
    %562 = vmatpush1.msra.mxu0 0.0
    %563 = vmatprep.subr.mxu0 0.0
    %564 = vmatpush1.msra.mxu0 0.0
    %565 = vmatprep.subr.mxu0 %v537
    %566 = vmatpush1.msra.mxu0 %v536
    %567 = vmatprep.subr.mxu0 %v497
    %568 = vmatpush1.msra.mxu0 %v496
    %569 = vmatprep.subr.mxu0 %v457
    %570 = vmatpush1.msra.mxu0 %v456
    %571 = vmatprep.subr.mxu0 %v417
    %572 = vmatpush1.msra.mxu0 %v416
    %573 = vmatprep.subr.mxu0 %v216
    %574 = vmatpush1.msra.mxu0 %v215
    %575 = vmatprep.subr.mxu0 %v377
    %576 = vmatpush1.msra.mxu0 %v376
    %577 = vmatprep.subr.mxu0 %v337
    %578 = vmatpush1.msra.mxu0 %v336
    %579 = vmatprep.subr.mxu0 %v297
    %580 = vmatpush1.msra.mxu0 %v296
    %581 = vmatprep.subr.mxu0 %v257
    %582 = vmatpush1.msra.mxu0 %v256
    %583 = vmatprep.subr.mxu0 0.0
    %584 = vmatpush2.msra.mxu0 0.0
    %585 = vmatprep.subr.mxu0 0.0
    %586 = vmatpush2.msra.mxu0 0.0
    %587 = vmatprep.subr.mxu0 0.0
    %588 = vmatpush2.msra.mxu0 0.0
    %589 = vmatprep.subr.mxu0 0.0
    %590 = vmatpush2.msra.mxu0 0.0
    %591 = vmatprep.subr.mxu0 0.0
    %592 = vmatpush2.msra.mxu0 0.0
    %593 = vmatprep.subr.mxu0 0.0
    %594 = vmatpush2.msra.mxu0 0.0
    %595 = vmatprep.subr.mxu0 0.0
    %596 = vmatpush2.msra.mxu0 0.0
    %597 = vmatprep.subr.mxu0 0.0
    %598 = vmatpush2.msra.mxu0 0.0
    %599 = vmatprep.subr.mxu0 0.0
    %600 = vmatpush2.msra.mxu0 0.0
    %601 = vmatprep.subr.mxu0 0.0
    %602 = vmatpush2.msra.mxu0 0.0
    %603 = vmatprep.subr.mxu0 0.0
    %604 = vmatpush2.msra.mxu0 0.0
    %605 = vmatprep.subr.mxu0 0.0
    %606 = vmatpush2.msra.mxu0 0.0
    %607 = vmatprep.subr.mxu0 0.0
    %608 = vmatpush2.msra.mxu0 0.0
    %609 = vmatprep.subr.mxu0 0.0
    %610 = vmatpush2.msra.mxu0 0.0
    %611 = vmatprep.subr.mxu0 0.0
    %612 = vmatpush2.msra.mxu0 0.0
    %613 = vmatprep.subr.mxu0 0.0
    %614 = vmatpush2.msra.mxu0 0.0
    %615 = vmatprep.mubr.f32.mxu0 0.0
    %616 = vmatmul.mubr.f32.gmra.mxu0 %v549
    %v617 = vpop.f32.mrf.mxu0
    %v618 = vadd.f32 %v545, %v617
    %v619 = vpop.f32.mrf.mxu0
    %v620 = vadd.f32 %v545, %v619
    %621 = vdwg.mxu0
    %622 = vmatprep.subr.mxu0 0.0
    %623 = vmatpush1.msra.mxu0 0.0
    %624 = vmatprep.subr.mxu0 0.0
    %625 = vmatpush1.msra.mxu0 0.0
    %626 = vmatprep.subr.mxu0 0.0
    %627 = vmatpush1.msra.mxu0 0.0
    %628 = vmatprep.subr.mxu0 0.0
    %629 = vmatpush1.msra.mxu0 0.0
    %630 = vmatprep.subr.mxu0 0.0
    %631 = vmatpush1.msra.mxu0 0.0
    %632 = vmatprep.subr.mxu0 0.0
    %633 = vmatpush1.msra.mxu0 0.0
    %634 = vmatprep.subr.mxu0 0.0
    %635 = vmatpush1.msra.mxu0 0.0
    %636 = vmatprep.subr.mxu0 %v539
    %637 = vmatpush1.msra.mxu0 %v538
    %638 = vmatprep.subr.mxu0 %v499
    %639 = vmatpush1.msra.mxu0 %v498
    %640 = vmatprep.subr.mxu0 %v459
    %641 = vmatpush1.msra.mxu0 %v458
    %642 = vmatprep.subr.mxu0 %v419
    %643 = vmatpush1.msra.mxu0 %v418
    %644 = vmatprep.subr.mxu0 %v218
    %645 = vmatpush1.msra.mxu0 %v217
    %646 = vmatprep.subr.mxu0 %v379
    %647 = vmatpush1.msra.mxu0 %v378
    %648 = vmatprep.subr.mxu0 %v339
    %649 = vmatpush1.msra.mxu0 %v338
    %650 = vmatprep.subr.mxu0 %v299
    %651 = vmatpush1.msra.mxu0 %v298
    %652 = vmatprep.subr.mxu0 %v259
    %653 = vmatpush1.msra.mxu0 %v258
    %654 = vmatprep.subr.mxu0 0.0
    %655 = vmatpush2.msra.mxu0 0.0
    %656 = vmatprep.subr.mxu0 0.0
    %657 = vmatpush2.msra.mxu0 0.0
    %658 = vmatprep.subr.mxu0 0.0
    %659 = vmatpush2.msra.mxu0 0.0
    %660 = vmatprep.subr.mxu0 0.0
    %661 = vmatpush2.msra.mxu0 0.0
    %662 = vmatprep.subr.mxu0 0.0
    %663 = vmatpush2.msra.mxu0 0.0
    %664 = vmatprep.subr.mxu0 0.0
    %665 = vmatpush2.msra.mxu0 0.0
    %666 = vmatprep.subr.mxu0 0.0
    %667 = vmatpush2.msra.mxu0 0.0
    %668 = vmatprep.subr.mxu0 0.0
    %669 = vmatpush2.msra.mxu0 0.0
    %670 = vmatprep.subr.mxu0 0.0
    %671 = vmatpush2.msra.mxu0 0.0
    %672 = vmatprep.subr.mxu0 0.0
    %673 = vmatpush2.msra.mxu0 0.0
    %674 = vmatprep.subr.mxu0 0.0
    %675 = vmatpush2.msra.mxu0 0.0
    %676 = vmatprep.subr.mxu0 0.0
    %677 = vmatpush2.msra.mxu0 0.0
    %678 = vmatprep.subr.mxu0 0.0
    %679 = vmatpush2.msra.mxu0 0.0
    %680 = vmatprep.subr.mxu0 0.0
    %681 = vmatpush2.msra.mxu0 0.0
    %682 = vmatprep.subr.mxu0 0.0
    %683 = vmatpush2.msra.mxu0 0.0
    %684 = vmatprep.subr.mxu0 0.0
    %685 = vmatpush2.msra.mxu0 0.0
    %686 = vmatprep.mubr.f32.mxu0 0.0
    %687 = vmatmul.mubr.f32.gmra.mxu0 %v549
    %v688 = vpop.f32.mrf.mxu0
    %v689 = vadd.f32 %v545, %v688
    %v690 = vpop.f32.mrf.mxu0
    %v691 = vadd.f32 %v545, %v690
    %692 = vdwg.mxu0
    %vm693 = vcmp.gt.f32.partialorder %v618, 0.0
    %vm694 = vcmp.gt.f32.partialorder %v620, 0.0
    %vm695 = vcmp.gt.f32.partialorder %v689, 0.0
    %vm696 = vcmp.gt.f32.partialorder %v691, 0.0
    %v697 = vmul.f32 %v618, 0.1
    %v698 = vmul.f32 %v620, 0.1
    %v699 = vmul.f32 %v689, 0.1
    %v700 = vmul.f32 %v691, 0.1
    %v701 = vsel %vm693, %v618, %v697
    %v702 = vsel %vm694, %v620, %v698
    %v703 = vsel %vm695, %v689, %v699
    %v704 = vsel %vm696, %v691, %v700
    %v705 = vadd.f32 %v701, %v50
    %v706 = vadd.f32 %v702, %v51
    %v707 = vadd.f32 %v703, %v52
    %v708 = vadd.f32 %v704, %v53
    %709 = vst [vmem:[#allocation7] sm:$0xff] %v705
    %710 = vst [vmem:[#allocation7 + $0x8] sm:$0xff] %v706
    %711 = vst [vmem:[#allocation7 + $0x10] sm:$0xff] %v707
    %712 = vst [vmem:[#allocation7 + $0x18] sm:$0xff] %v708
    // Predicated region
    $region34: #{tpu_custom_call.1} parent=1 // pred_check
      _
    $region35: #{tpu_custom_call.1} parent=1 // pred_check_branch
      %714 = sbr.rel (0) target = $region37
    $region36: #{tpu_custom_call.1} parent=1 // pred_region
      %s716 = ssub.s32 512, 512
      %717 = vsyncadd [#allocation4], %s716
      %s719 = sshll.u32 [#allocation7], 4
      %s720 = int_to_ptr.vmem [resolvable:$true] %s719
      %722 = dma.vmem_to_hbm [thread:$0]  %s720, 512, %s6, [#allocation4]
    $region37: #{tpu_custom_call.1} parent=1 // pred_fallthru
      _
    // Predicated region
    $region38: #{tpu_custom_call.1} parent=1 // pred_check
      _
    $region39: #{tpu_custom_call.1} parent=1 // pred_check_branch
      %724 = sbr.rel (0) target = $region41
    $region40: #{tpu_custom_call.1} parent=1 // pred_region
      %725 = dma.done [#allocation4], 512
    $region41: #{tpu_custom_call.1} parent=1 // pred_fallthru
      _
    %726 = vsyncpa [#allocation3], 1
    %727 = vsyncpa [#allocation6], 1
    %728 = vsyncpa [#allocation4], 1

</llo_original>
